<compile_context>
chip_gen: v5e
topology: v5e:2x2
jax: 0.10.0
libtpu: 0.0.40
codegen_flags: <defaults>
</compile_context>

<pallas_src>
import jax
import jax.numpy as jnp
from jax.experimental import pallas as pl
from jax.experimental.pallas import tpu as pltpu

_EPS = 1e-5
_LANES = 128
_TILE_M = 4096          # (4096, 128) f32 tile = 2 MiB per pipelined buffer
_FUSED_MAX_ROWS = 4096  # <= 2 MiB of data -> single fused VMEM-resident kernel


def _fold_affine(p, mu, var):
    """Collapse conv->BN->conv->BN->conv->BN into (alpha, beta).

    Running state: current layer output = s * (x - mu) + off.
    BN of that tensor has batch mean == off and batch var == s^2 * var(x).
    Works on traced scalars, so it can run inside a Pallas kernel.
    """
    eps = jnp.float32(_EPS)
    s = p[0]                                     # conv1 (its bias cancels in bn1)
    inv = jax.lax.rsqrt(s * s * var + eps)       # bn1
    s, off = s * inv * p[2], p[3]
    s, off = s * p[4], off * p[4] + p[5]         # conv2
    inv = jax.lax.rsqrt(s * s * var + eps)       # nested BatchNorm2d
    s, off = s * inv * p[6], p[7]
    s, off = s * p[8], off * p[8] + p[9]         # nested Conv2d
    inv = jax.lax.rsqrt(s * s * var + eps)       # wrapped BatchNorm2d
    s, off = s * inv * p[10], p[11]
    return s, off - s * mu                       # alpha, beta


def _make_fused_kernel(total, masked):
    """Single-dispatch path: stats + fold + FMA on a VMEM-resident slab."""
    inv_n = 1.0 / float(total)
    full_rows = total // _LANES
    rem = total % _LANES

    def kernel(params_ref, x_ref, o_ref):
        xv = x_ref[...].astype(jnp.float32)
        if masked:  # only when the wrapper had to lane-pad (total % 128 != 0)
            rid = jax.lax.broadcasted_iota(jnp.int32, xv.shape, 0)
            lid = jax.lax.broadcasted_iota(jnp.int32, xv.shape, 1)
            valid = (rid < full_rows) | ((rid == full_rows) & (lid < rem))
            xs = jnp.where(valid, xv, 0.0)
        else:
            xs = xv
        mu = jnp.sum(xs) * inv_n
        d = xv - mu
        if masked:
            d = jnp.where(valid, d, 0.0)
        var = jnp.sum(d * d) * inv_n             # centered -> numerically stable
        p = [params_ref[k] for k in range(12)]
        alpha, beta = _fold_affine(p, mu, var)
        o_ref[...] = (xv * alpha + beta).astype(o_ref.dtype)

    return kernel


def _make_stats_kernel(total, tile_m, blocks_per_core):
    """Pass 1 (large inputs): per-lane sum and shifted sum-of-squares."""
    full_rows = total // _LANES
    rem = total % _LANES

    def kernel(shift_ref, x_ref, sum_ref, sq_ref):
        @pl.when(pl.program_id(1) == 0)
        def _init():
            sum_ref[...] = jnp.zeros_like(sum_ref)
            sq_ref[...] = jnp.zeros_like(sq_ref)

        xv = x_ref[...].astype(jnp.float32)
        # Mask is based on the *nominal* block for this grid point, so both the
        # ragged last block and the clamped duplicate block (odd block count on
        # the 2-way core split) contribute exactly zero.
        nominal = pl.program_id(0) * blocks_per_core + pl.program_id(1)
        rid = jax.lax.broadcasted_iota(jnp.int32, xv.shape, 0) + nominal * tile_m
        if rem:
            lid = jax.lax.broadcasted_iota(jnp.int32, xv.shape, 1)
            valid = (rid < full_rows) | ((rid == full_rows) & (lid < rem))
        else:
            valid = rid < full_rows

        sh = shift_ref[0]                          # variance anchor (= x[0])
        xs = jnp.where(valid, xv, 0.0)
        d = jnp.where(valid, xv - sh, 0.0)
        sum_ref[...] += jnp.sum(xs, axis=0).reshape(sum_ref.shape)
        sq_ref[...] += jnp.sum(d * d, axis=0).reshape(sq_ref.shape)

    return kernel


def _make_apply_kernel(total):
    """Pass 2 (large inputs): fold alpha/beta in-kernel, then y = alpha*x+beta."""
    inv_n = 1.0 / float(total)

    def kernel(shift_ref, params_ref, sum_ref, sq_ref, x_ref, o_ref):
        sh = shift_ref[0]
        mu = jnp.sum(sum_ref[...]) * inv_n
        msq = jnp.sum(sq_ref[...]) * inv_n                 # E[(x - sh)^2]
        var = jnp.maximum(msq - (mu - sh) * (mu - sh), 0.0)
        p = [params_ref[k] for k in range(12)]
        alpha, beta = _fold_affine(p, mu, var)
        o_ref[...] = (x_ref[...].astype(jnp.float32) * alpha + beta).astype(o_ref.dtype)

    return kernel


def mymodel00_forward(x_nchw, params, *, alias_input=False):
    """alias_input=True lets the x slab be written in place (pair with jit donation)."""
    N, C, H, W = x_nchw.shape
    assert C == 1, "MyModel00 uses 1-channel convs/BN"
    total = N * C * H * W
    dtype = x_nchw.dtype

    x_flat = x_nchw.reshape(-1)                    # zero-copy
    rem = total % _LANES
    if rem:
        # TODO(synk): rare non-lane-aligned case still pays one pad + one slice copy.
        x_flat = jnp.pad(x_flat, (0, _LANES - rem))
    rows = x_flat.shape[0] // _LANES
    x2d = x_flat.reshape(rows, _LANES)             # zero-copy, lane-dense

    params_f32 = params.astype(jnp.float32)
    smem_spec = pl.BlockSpec(memory_space=pltpu.MemorySpace.SMEM)

    if rows <= _FUSED_MAX_ROWS:
        # ---------- fused path: one dispatch, 1 HBM read + 1 HBM write ----------
        full_spec = pl.BlockSpec((rows, _LANES), lambda i: (0, 0))
        out2d = pl.pallas_call(
            _make_fused_kernel(total, masked=bool(rem)),
            out_shape=jax.ShapeDtypeStruct((rows, _LANES), dtype),
            grid=(1,),
            in_specs=[smem_spec, full_spec],
            out_specs=full_spec,
            input_output_aliases=({1: 0} if alias_input else {}),
            compiler_params=pltpu.CompilerParams(dimension_semantics=("arbitrary",)),
        )(params_f32, x2d)
    else:
        # ---------- two-pass fallback for large inputs ----------
        tile_m = _TILE_M
        nblocks = pl.cdiv(rows, tile_m)            # >= 2 here
        n_par = 2                                  # shards pass 1 across v7x's 2 TCs
        bpc = pl.cdiv(nblocks, n_par)
        shift = x_flat[:1].astype(jnp.float32)     # (1,) anchor for stable variance

        # Pass 1: per-core (sum, shifted sum-of-squares) accumulators.
        x_stats_spec = pl.BlockSpec(
            (tile_m, _LANES),
            lambda c, i: (jnp.minimum(c * bpc + i, nblocks - 1), 0))
        acc_spec = pl.BlockSpec((1, 1, _LANES), lambda c, i: (c, 0, 0))
        sum_p, sq_p = pl.pallas_call(
            _make_stats_kernel(total, tile_m, bpc),
            out_shape=(jax.ShapeDtypeStruct((n_par, 1, _LANES), jnp.float32),
                       jax.ShapeDtypeStruct((n_par, 1, _LANES), jnp.float32)),
            grid=(n_par, bpc),
            in_specs=[smem_spec, x_stats_spec],
            out_specs=(acc_spec, acc_spec),
            compiler_params=pltpu.CompilerParams(
                dimension_semantics=("parallel", "arbitrary")),
        )(shift, x2d)

        # Pass 2: fold alpha/beta in-kernel and apply the FMA (parallel grid).
        tile_spec = pl.BlockSpec((tile_m, _LANES), lambda i: (i, 0))
        stat_spec = pl.BlockSpec((n_par, 1, _LANES), lambda i: (0, 0, 0))
        out2d = pl.pallas_call(
            _make_apply_kernel(total),
            out_shape=jax.ShapeDtypeStruct((rows, _LANES), dtype),
            grid=(nblocks,),
            in_specs=[smem_spec, smem_spec, stat_spec, stat_spec, tile_spec],
            out_specs=tile_spec,
            input_output_aliases=({4: 0} if alias_input else {}),
            compiler_params=pltpu.CompilerParams(dimension_semantics=("parallel",)),
        )(shift, params_f32, sum_p, sq_p, x2d)

    out_flat = out2d.reshape(-1)
    if rem:
        out_flat = out_flat[:total]
    return out_flat.reshape(N, C, H, W)


def _reference_forward(x_nchw, params):
    """Pure-JAX per-stage reference with the original module's semantics."""
    x = x_nchw.astype(jnp.float32)

    def bn(v, gamma, beta):
        mu = jnp.mean(v)
        var = jnp.mean((v - mu) ** 2)
        return (v - mu) * jax.lax.rsqrt(var + _EPS) * gamma + beta

    y = x * params[0] + params[1]        # conv1
    y = bn(y, params[2], params[3])      # bn1
    y = y * params[4] + params[5]        # conv2
    y = bn(y, params[6], params[7])      # nested BN
    y = y * params[8] + params[9]        # nested conv
    y = bn(y, params[10], params[11])    # wrapped BN
    return y.astype(x_nchw.dtype)


if __name__ == "__main__":
    key = jax.random.PRNGKey(0)
    kx, kw = jax.random.split(key)

    # Small shape consistent with the module: N=2, C=1 (required), H=W=16.
    x = jax.random.normal(kx, (2, 1, 16, 16), dtype=jnp.float32)

    # Deterministic parameters (1x1 conv weights/biases and BN gamma/beta are scalars).
    wvals = jax.random.normal(kw, (6,), dtype=jnp.float32) * 0.5
    params = jnp.array(
        [
            wvals[0], wvals[1],   # conv1.weight, conv1.bias
            1.2, 0.1,             # bn1.gamma, bn1.beta
            wvals[2], wvals[3],   # conv2.weight, conv2.bias
            0.8, -0.05,           # nested[0] (BN) gamma, beta
            wvals[4], wvals[5],   # nested[1] (conv) weight, bias
            1.1, 0.2,             # wrapped.mod (BN) gamma, beta
        ],
        dtype=jnp.float32,
    )

    fwd = jax.jit(mymodel00_forward)
    out = jax.block_until_ready(fwd(x, params))

    ref = _reference_forward(x, params)
    assert out.shape == x.shape
    assert jnp.allclose(out, ref, atol=1e-4, rtol=1e-4), float(
        jnp.max(jnp.abs(out - ref))
    )

    print("KERNEL_OK")
</pallas_src>

<mosaic_0001>
module attributes {stable_mosaic.version = 11 : i64} {
  func.func @kernel(%arg0: i32, %arg1: memref<12xf32, #tpu.memory_space<smem>>, %arg2: memref<4x128xf32, #tpu.memory_space<vmem>>, %arg3: memref<4x128xf32, #tpu.memory_space<vmem>>) attributes {dimension_semantics = [#tpu.dimension_semantics<arbitrary>], iteration_bounds = array<i64: 1>, scalar_prefetch = 0 : i64, scratch_operands = 0 : i64, tpu.core_type = #tpu.core_type<tc>, window_params = [{transform_indices = @transform_0, window_bounds = array<i64: 12>}, {pipeline_mode = #tpu.pipeline_mode<synchronous>, transform_indices = @transform_1, window_bounds = array<i64: 4, 128>}, {pipeline_mode = #tpu.pipeline_mode<synchronous>, transform_indices = @transform_2, window_bounds = array<i64: 4, 128>}]} {
    %c0 = arith.constant 0 : index
    %c0_0 = arith.constant 0 : index
    %0 = vector.load %arg2[%c0, %c0_0] : memref<4x128xf32, #tpu.memory_space<vmem>>, vector<4x128xf32>
    %1 = vector.shape_cast %0 : vector<4x128xf32> to vector<1x4x128xf32>
    %cst = arith.constant dense<0.000000e+00> : vector<1xf32>
    %2 = vector.multi_reduction <add>, %1, %cst [1, 2] : vector<1x4x128xf32> to vector<1xf32>
    %3 = vector.shape_cast %2 : vector<1xf32> to vector<1x1x1xf32>
    %4 = vector.extract %3[0, 0, 0] : f32 from vector<1x1x1xf32>
    %cst_1 = arith.constant 0.001953125 : f32
    %5 = arith.mulf %4, %cst_1 : f32
    %6 = vector.broadcast %5 : f32 to vector<4x128xf32>
    %7 = arith.subf %0, %6 : vector<4x128xf32>
    %8 = arith.mulf %7, %7 : vector<4x128xf32>
    %9 = vector.shape_cast %8 : vector<4x128xf32> to vector<1x4x128xf32>
    %cst_2 = arith.constant dense<0.000000e+00> : vector<1xf32>
    %10 = vector.multi_reduction <add>, %9, %cst_2 [1, 2] : vector<1x4x128xf32> to vector<1xf32>
    %11 = vector.shape_cast %10 : vector<1xf32> to vector<1x1x1xf32>
    %12 = vector.extract %11[0, 0, 0] : f32 from vector<1x1x1xf32>
    %cst_3 = arith.constant 0.001953125 : f32
    %13 = arith.mulf %12, %cst_3 : f32
    %c0_4 = arith.constant 0 : index
    %14 = memref.load %arg1[%c0_4] : memref<12xf32, #tpu.memory_space<smem>>
    %c2 = arith.constant 2 : index
    %15 = memref.load %arg1[%c2] : memref<12xf32, #tpu.memory_space<smem>>
    %c4 = arith.constant 4 : index
    %16 = memref.load %arg1[%c4] : memref<12xf32, #tpu.memory_space<smem>>
    %c6 = arith.constant 6 : index
    %17 = memref.load %arg1[%c6] : memref<12xf32, #tpu.memory_space<smem>>
    %c8 = arith.constant 8 : index
    %18 = memref.load %arg1[%c8] : memref<12xf32, #tpu.memory_space<smem>>
    %c10 = arith.constant 10 : index
    %19 = memref.load %arg1[%c10] : memref<12xf32, #tpu.memory_space<smem>>
    %c11 = arith.constant 11 : index
    %20 = memref.load %arg1[%c11] : memref<12xf32, #tpu.memory_space<smem>>
    %21 = arith.mulf %14, %14 : f32
    %22 = arith.mulf %21, %13 : f32
    %cst_5 = arith.constant 9.99999974E-6 : f32
    %23 = arith.addf %22, %cst_5 : f32
    %24 = math.rsqrt %23 : f32
    %25 = arith.mulf %14, %24 : f32
    %26 = arith.mulf %25, %15 : f32
    %27 = arith.mulf %26, %16 : f32
    %28 = arith.mulf %27, %27 : f32
    %29 = arith.mulf %28, %13 : f32
    %cst_6 = arith.constant 9.99999974E-6 : f32
    %30 = arith.addf %29, %cst_6 : f32
    %31 = math.rsqrt %30 : f32
    %32 = arith.mulf %27, %31 : f32
    %33 = arith.mulf %32, %17 : f32
    %34 = arith.mulf %33, %18 : f32
    %35 = arith.mulf %34, %34 : f32
    %36 = arith.mulf %35, %13 : f32
    %cst_7 = arith.constant 9.99999974E-6 : f32
    %37 = arith.addf %36, %cst_7 : f32
    %38 = math.rsqrt %37 : f32
    %39 = arith.mulf %34, %38 : f32
    %40 = arith.mulf %39, %19 : f32
    %41 = arith.mulf %40, %5 : f32
    %42 = arith.subf %20, %41 : f32
    %43 = vector.broadcast %40 : f32 to vector<4x128xf32>
    %44 = arith.mulf %0, %43 : vector<4x128xf32>
    %45 = vector.broadcast %42 : f32 to vector<4x128xf32>
    %46 = arith.addf %44, %45 : vector<4x128xf32>
    %c0_8 = arith.constant 0 : index
    %c0_9 = arith.constant 0 : index
    %47 = vector.load %arg3[%c0_8, %c0_9] : memref<4x128xf32, #tpu.memory_space<vmem>>, vector<4x128xf32>
    tpu.vector_store %arg3[%c0_8, %c0_9], %46 {strides = array<i32>} : memref<4x128xf32, #tpu.memory_space<vmem>>, vector<4x128xf32>,
    return
  }
  func.func @transform_0(%arg0: i32) -> i32 {
    %c0_i32 = arith.constant 0 : i32
    %c0_i32_0 = arith.constant 0 : i32
    return %c0_i32 : i32
  }
  func.func @transform_1(%arg0: i32) -> (i32, i32) {
    %c0_i32 = arith.constant 0 : i32
    %c0_i32_0 = arith.constant 0 : i32
    %c0_i32_1 = arith.constant 0 : i32
    return %c0_i32, %c0_i32_0 : i32, i32
  }
  func.func @transform_2(%arg0: i32) -> (i32, i32) {
    %c0_i32 = arith.constant 0 : i32
    %c0_i32_0 = arith.constant 0 : i32
    %c0_i32_1 = arith.constant 0 : i32
    return %c0_i32, %c0_i32_0 : i32, i32
  }
}

</mosaic_0001>

<llo_original>
// kernel: mymodel00_forward.1
$region0: #{mymodel00_forward.1}
  #allocation0 [shape = 'u32[]', space=smem, size = 0x4, offset = 0x4, fixed_abs, tag = 'smem constant byte address 0x4 - core index']
  #allocation1 [shape = 'u32[72,128]{1,0:T(1,128)}', space=vmem, size = 0x9000, scoped, tag = 'internal scratch']
  %s0 = inlined_call_operand.vmem [shape: f32[12], index: 0, kind: input, shape index: {}]
  %s1 = inlined_call_operand.vmem [shape: f32[4,128], index: 1, kind: input, shape index: {}]
  %s2 = inlined_call_operand.vmem [shape: f32[4,128], index: 2, kind: output, shape index: {}]
  %s3 = sld [smem:[#allocation0]]
  $region22: #{mymodel00_forward.1} parent=0
    _
  %s5 = ssub.s32 1, %s3
  %s6 = scalar_select 0, %s5, %s3
  $region1: #{mymodel00_forward.1} parent=0
    #allocation2 [shape = 'u8[512]{0}', space=smem, size = 0x200, scoped, tag = 'input window, operand 0, single buffered']
    #allocation3 [shape = 's32[1]{0}', space=sflag, size = 0x4, scoped, tag = 'scoped memory for mymodel00_forward.1']
    %7 = vsyncpa [#allocation3], 0
    // Predicated region
    $region2: #{mymodel00_forward.1} parent=1 // pred_check
      _
    $region3: #{mymodel00_forward.1} parent=1 // pred_check_branch
      %9 = sbr.rel (0) target = $region5
    $region4: #{mymodel00_forward.1} parent=1 // pred_region
      %11 = vsyncadd [#allocation3], 0
      %s13 = sshll.u32 %s0, 4
      %s14 = int_to_ptr.vmem [resolvable:$true] %s13
      %16 = dma.vmem_to_smem %s14, 16, [#allocation2], [#allocation3]
    $region5: #{mymodel00_forward.1} parent=1 // pred_fallthru
      _
    // Predicated region
    $region6: #{mymodel00_forward.1} parent=1 // pred_check
      _
    $region7: #{mymodel00_forward.1} parent=1 // pred_check_branch
      %18 = sbr.rel (0) target = $region9
    $region8: #{mymodel00_forward.1} parent=1 // pred_region
      _
    $region9: #{mymodel00_forward.1} parent=1 // pred_fallthru
      _
    // Predicated region
    $region10: #{mymodel00_forward.1} parent=1 // pred_check
      _
    $region11: #{mymodel00_forward.1} parent=1 // pred_check_branch
      %20 = sbr.rel (0) target = $region13
    $region12: #{mymodel00_forward.1} parent=1 // pred_region
      %22 = dma.done [#allocation3], 16
    $region13: #{mymodel00_forward.1} parent=1 // pred_fallthru
      _
    %23 = sfence
    %v24 = vld [vmem:[%s1] sm:$0xf]
    %vm25 = vcmask 1043456
    %v26 = vsel %vm25, %v24, 0.0
    %27 = vadd.xlane.f32.xlu0 %v26
    %v28 = vpop.xlane.xlu0 %27
    %v29 = vrot.slane %v28, 4
    %v30 = vadd.f32 %v28, %v29
    %v31 = vrot.slane %v30, 2
    %v32 = vadd.f32 %v30, %v31
    %v33 = vrot.slane %v32, 1
    %v34 = vadd.f32 %v32, %v33
    %s35 = vtos %v34
    %s36 = smul.f32 %s35, 0.001953125
    %v37 = vstv %s36
    %v38 = vsub.f32 %v24, %v37
    %v39 = vmul.f32 %v38, %v38
    %v40 = vsel %vm25, %v39, 0.0
    %41 = vadd.xlane.f32.xlu0 %v40
    %v42 = vpop.xlane.xlu0 %41
    %v43 = vrot.slane %v42, 4
    %v44 = vadd.f32 %v42, %v43
    %v45 = vrot.slane %v44, 2
    %v46 = vadd.f32 %v44, %v45
    %v47 = vrot.slane %v46, 1
    %v48 = vadd.f32 %v46, %v47
    %s49 = vtos %v48
    %s50 = smul.f32 %s49, 0.001953125
    %s51 = sld [smem:[#allocation2]]
    %s52 = sld [smem:[#allocation2 + $0x2]]
    %s53 = sld [smem:[#allocation2 + $0x4]]
    %s54 = sld [smem:[#allocation2 + $0x6]]
    %s55 = sld [smem:[#allocation2 + $0x8]]
    %s56 = sld [smem:[#allocation2 + $0xa]]
    %s57 = sld [smem:[#allocation2 + $0xb]]
    %s58 = smul.f32 %s51, %s51
    %s59 = smul.f32 %s58, %s50
    %s60 = sadd.f32 %s59, 1e-05
    %v61 = vstv %s60
    %v62 = vrsqrt.pop %v61
    %v63 = vmul.f32 %v62, %v61
    %v64 = vmul.f32 %v63, %v62
    %v65 = vmul.f32 0.5, %v64
    %v66 = vsub.f32 1.5, %v65
    %v67 = vmul.f32 %v62, %v66
    %vm68 = vweird.f32 %v61
    %vm69 = vweird.f32 %v62
    %vm70 = vmor %vm68, %vm69
    %v71 = vsel %vm70, %v62, %v67
    %s72 = vtos %v71
    %s73 = smul.f32 %s51, %s72
    %s74 = smul.f32 %s73, %s52
    %s75 = smul.f32 %s74, %s53
    %s76 = smul.f32 %s75, %s75
    %s77 = smul.f32 %s76, %s50
    %s78 = sadd.f32 %s77, 1e-05
    %v79 = vstv %s78
    %v80 = vrsqrt.pop %v79
    %v81 = vmul.f32 %v80, %v79
    %v82 = vmul.f32 %v81, %v80
    %v83 = vmul.f32 0.5, %v82
    %v84 = vsub.f32 1.5, %v83
    %v85 = vmul.f32 %v80, %v84
    %vm86 = vweird.f32 %v79
    %vm87 = vweird.f32 %v80
    %vm88 = vmor %vm86, %vm87
    %v89 = vsel %vm88, %v80, %v85
    %s90 = vtos %v89
    %s91 = smul.f32 %s75, %s90
    %s92 = smul.f32 %s91, %s54
    %s93 = smul.f32 %s92, %s55
    %s94 = smul.f32 %s93, %s93
    %s95 = smul.f32 %s94, %s50
    %s96 = sadd.f32 %s95, 1e-05
    %v97 = vstv %s96
    %v98 = vrsqrt.pop %v97
    %v99 = vmul.f32 %v98, %v97
    %v100 = vmul.f32 %v99, %v98
    %v101 = vmul.f32 0.5, %v100
    %v102 = vsub.f32 1.5, %v101
    %v103 = vmul.f32 %v98, %v102
    %vm104 = vweird.f32 %v97
    %vm105 = vweird.f32 %v98
    %vm106 = vmor %vm104, %vm105
    %v107 = vsel %vm106, %v98, %v103
    %s108 = vtos %v107
    %s109 = smul.f32 %s93, %s108
    %s110 = smul.f32 %s109, %s56
    %s111 = smul.f32 %s110, %s36
    %s112 = ssub.f32 %s57, %s111
    %v113 = vstv %s110
    %v114 = vmul.f32 %v24, %v113
    %v115 = vstv %s112
    %v116 = vadd.f32 %v114, %v115
    %117 = vst [vmem:[%s2] sm:$0xf] %v116
    // Predicated region
    $region14: #{mymodel00_forward.1} parent=1 // pred_check
      _
    $region15: #{mymodel00_forward.1} parent=1 // pred_check_branch
      %119 = sbr.rel (0) target = $region17
    $region16: #{mymodel00_forward.1} parent=1 // pred_region
      _
    $region17: #{mymodel00_forward.1} parent=1 // pred_fallthru
      _
    // Predicated region
    $region18: #{mymodel00_forward.1} parent=1 // pred_check
      _
    $region19: #{mymodel00_forward.1} parent=1 // pred_check_branch
      %121 = sbr.rel (0) target = $region21
    $region20: #{mymodel00_forward.1} parent=1 // pred_region
      _
    $region21: #{mymodel00_forward.1} parent=1 // pred_fallthru
      _
    %122 = vsyncpa [#allocation3], 1

</llo_original>
